<compile_context>
chip_gen: v7x
topology: tpu7x:2x2x1
jax: 0.10.0
libtpu: 0.0.40
codegen_flags: <defaults>
</compile_context>

<pallas_src>
import jax
import jax.numpy as jnp
from jax.experimental import pallas as pl
from jax.experimental.pallas import tpu as pltpu

_LANES = 128
_SUBLANES = 8


def _round_up(x, m):
    return -(-x // m) * m


def _laplace_density_kernel(scal_ref, sdf_ref, out_ref):
    # scal_ref: SMEM (3,) f32 -> [alpha, 0.5*alpha, -alpha]
    # sdf_ref : VMEM block of sdf values (native dtype)
    # out_ref : VMEM block of densities (caller dtype)
    alpha = scal_ref[0]
    half_alpha = scal_ref[1]
    neg_alpha = scal_ref[2]
    sdf = sdf_ref[...].astype(jnp.float32)
    e = jnp.exp(jnp.abs(sdf) * neg_alpha)           # exp(-|sdf|/beta): 1 EUP op
    t = half_alpha * e
    # Algebraically identical to alpha*(0.5 + 0.5*sign(sdf)*expm1(-|sdf|/beta)),
    # with the trailing alpha-multiply folded into the select operands.
    out_ref[...] = jnp.where(sdf >= 0.0, t, alpha - t).astype(out_ref.dtype)


def _choose_tiles(L, A, B, itemsize,
                  single_block_bytes=256 * 1024,
                  target_block_bytes=1024 * 1024):
    """Pick (l_tile, a_tile, grid) for the canonical (L, A, B) view.

    Sizes are computed with the TPU (8, 128) tile padding of the last two dims
    so the estimate matches the real VMEM footprint of each pipelined buffer.
    """
    b_pad = _round_up(max(B, 1), _LANES)
    a_pad = _round_up(max(A, 1), _SUBLANES)
    slice_bytes = a_pad * b_pad * itemsize          # one (1, A, B) slice
    total_bytes = L * slice_bytes

    if total_bytes <= single_block_bytes:
        return L, A, (1, 1)                         # tiny: one full-array block

    # Aim for >= 2 grid steps so input/output double-buffering actually
    # overlaps DMA with compute, while keeping the 4 pipelined buffers small.
    tgt = min(target_block_bytes, max(total_bytes // 2, single_block_bytes))

    if slice_bytes <= tgt:
        l_tile = min(L, max(1, tgt // slice_bytes))
        return int(l_tile), A, (pl.cdiv(L, int(l_tile)), 1)

    # A single (1, A, B) slice already exceeds the target: tile the sublane
    # axis too (block second-to-last dim must be a multiple of 8 or == A).
    row_bytes = b_pad * itemsize
    a_tile = max(_SUBLANES, (tgt // row_bytes) // _SUBLANES * _SUBLANES)
    if a_tile >= A:
        return 1, A, (L, 1)
    return 1, int(a_tile), (L, pl.cdiv(A, int(a_tile)))


def _dimension_semantics(grid):
    lead = pltpu.PARALLEL
    try:
        kind = jax.devices()[0].device_kind.lower()
    except Exception:
        kind = ""
    # v7x has 2 TensorCores per chip; shard the leading (independent) grid
    # axis across them.  Single-TC chips (v5e/v6e) keep plain "parallel".
    if "v7" in kind and grid[0] >= 2 and grid[0] % 2 == 0:
        lead = getattr(pltpu, "CORE_PARALLEL", pltpu.PARALLEL)
    return (lead, pltpu.PARALLEL)


def _run_3d(x3d, scalars):
    """Run the elementwise density kernel over a canonical (L, A, B) array."""
    L, A, B = x3d.shape
    itemsize = jnp.dtype(x3d.dtype).itemsize
    l_tile, a_tile, grid = _choose_tiles(L, A, B, itemsize)
    block = (l_tile, a_tile, B)

    block_bytes = (l_tile * _round_up(a_tile, _SUBLANES)
                   * _round_up(B, _LANES) * itemsize)
    pipeline_bytes = 4 * block_bytes                # in + out, double-buffered

    n_pad = L * _round_up(A, _SUBLANES) * _round_up(B, _LANES)
    cost = pl.CostEstimate(
        flops=int(6 * n_pad),
        transcendentals=int(n_pad),
        bytes_accessed=int(2 * n_pad * itemsize + 12),
    )

    compiler_kwargs = dict(dimension_semantics=_dimension_semantics(grid))
    if pipeline_bytes > 12 * 1024 * 1024:
        # Only triggered when a single 8-row strip of a huge last dim exceeds
        # the ~1 MiB target; otherwise stay under every gen's scoped default.
        compiler_kwargs["vmem_limit_bytes"] = int(
            min(pipeline_bytes + (4 << 20), 64 << 20))

    return pl.pallas_call(
        _laplace_density_kernel,
        out_shape=jax.ShapeDtypeStruct((L, A, B), x3d.dtype),
        grid_spec=pltpu.PrefetchScalarGridSpec(
            num_scalar_prefetch=0,
            grid=grid,
            in_specs=[
                pl.BlockSpec(memory_space=pltpu.SMEM),           # scalars
                pl.BlockSpec(block, lambda i, j: (i, j, 0)),     # sdf tile
            ],
            out_specs=pl.BlockSpec(block, lambda i, j: (i, j, 0)),
        ),
        compiler_params=pltpu.CompilerParams(**compiler_kwargs),
        cost_estimate=cost,
    )(scalars, x3d)


def laplace_density(sdf, beta_param, beta_min, beta=None):
    """Pallas forward of Density/LaplaceDensity.  sdf: any shape, float dtype.

    If `beta` is given it is used directly (matching `density_func(sdf, beta)`);
    otherwise beta = |beta_param| + beta_min.
    """
    orig_shape = sdf.shape

    if beta is None:
        beta_val = (jnp.abs(jnp.asarray(beta_param, jnp.float32))
                    + jnp.asarray(beta_min, jnp.float32))
    else:
        beta_val = jnp.asarray(beta, jnp.float32)
    alpha = 1.0 / beta_val                          # scalar-only XLA ops (free)
    scalars = jnp.stack([alpha, 0.5 * alpha, -alpha]).astype(jnp.float32)

    x = sdf
    valid_n = None    # set when the rank-1 fallback pads to a 128 multiple
    if x.ndim == 0:
        x = x.reshape(1, 1, 1)
    elif x.ndim == 1:
        # Rank-1 fallback: build a lane-dense (rows, 128) view.
        # TODO(synk): ragged rank-1 inputs still cost one pad + one slice pass;
        #             rank>=2 inputs (the common case) run with zero extra
        #             wrapper-side HBM passes.
        n = x.shape[0]
        rem = n % _LANES
        if rem:
            x = jnp.pad(x, (0, _LANES - rem))
            valid_n = n
        x = x.reshape(1, x.shape[0] // _LANES, _LANES)
    elif x.ndim == 2:
        x = x.reshape(1, *x.shape)                        # layout-free
    else:
        x = x.reshape(-1, x.shape[-2], x.shape[-1])       # layout-free collapse

    out = _run_3d(x, scalars)

    if valid_n is not None:
        out = out.reshape(-1)[:valid_n]
    return out.reshape(orig_shape)


def _reference(sdf, beta_param, beta_min):
    beta = jnp.abs(beta_param) + beta_min
    alpha = 1.0 / beta
    return alpha * (0.5 + 0.5 * jnp.sign(sdf) * jnp.expm1(-jnp.abs(sdf) / beta))


if __name__ == "__main__":
    key = jax.random.PRNGKey(0)
    # Deterministic parameter init (params_init = {"beta": 0.1, "beta_min": 1e-4})
    beta_param = jnp.float32(0.1)
    beta_min = jnp.float32(1e-4)

    k0, k1, k2, k3 = jax.random.split(key, 4)

    # Primary example: sdf values over sample points, batch=2, channels=4, 16x16.
    sdf = jax.random.normal(k0, (2, 4, 16, 16), dtype=jnp.float32) * 0.5
    out = jax.block_until_ready(laplace_density(sdf, beta_param, beta_min))
    ref = _reference(sdf, beta_param, beta_min)
    assert out.shape == sdf.shape and out.dtype == sdf.dtype
    assert jnp.allclose(out, ref, atol=1e-5, rtol=1e-5)

    # Extra coverage: tiled multi-step grid, rank-2 non-128 lanes, rank-1 ragged.
    for shp, kk in (((512, 4, 128), k1), ((100, 48), k2), ((1000,), k3)):
        x = jax.random.normal(kk, shp, dtype=jnp.float32) * 0.5
        o = jax.block_until_ready(laplace_density(x, beta_param, beta_min))
        r = _reference(x, beta_param, beta_min)
        assert o.shape == x.shape and o.dtype == x.dtype
        assert jnp.allclose(o, r, atol=1e-5, rtol=1e-5)

    print("KERNEL_OK")
</pallas_src>

<mosaic_0001>
module attributes {stable_mosaic.version = 11 : i64} {
  func.func @_laplace_density_kernel(%arg0: i32, %arg1: i32, %arg2: memref<3xf32, #tpu.memory_space<smem>>, %arg3: memref<8x16x16xf32, #tpu.memory_space<vmem>>, %arg4: memref<8x16x16xf32, #tpu.memory_space<vmem>>) attributes {dimension_semantics = [#tpu.dimension_semantics<parallel>, #tpu.dimension_semantics<parallel>], iteration_bounds = array<i64: 1, 1>, scalar_prefetch = 0 : i64, scratch_operands = 0 : i64, tpu.core_type = #tpu.core_type<tc>, window_params = [{transform_indices = @transform_0, window_bounds = array<i64: 3>}, {transform_indices = @transform_1, window_bounds = array<i64: 8, 16, 16>}, {transform_indices = @transform_2, window_bounds = array<i64: 8, 16, 16>}]} {
    %c0 = arith.constant 0 : index
    %0 = memref.load %arg2[%c0] : memref<3xf32, #tpu.memory_space<smem>>
    %c1 = arith.constant 1 : index
    %1 = memref.load %arg2[%c1] : memref<3xf32, #tpu.memory_space<smem>>
    %c2 = arith.constant 2 : index
    %2 = memref.load %arg2[%c2] : memref<3xf32, #tpu.memory_space<smem>>
    %c0_0 = arith.constant 0 : index
    %c0_1 = arith.constant 0 : index
    %c0_2 = arith.constant 0 : index
    %3 = vector.load %arg3[%c0_0, %c0_1, %c0_2] : memref<8x16x16xf32, #tpu.memory_space<vmem>>, vector<8x16x16xf32>
    %4 = math.absf %3 : vector<8x16x16xf32>
    %5 = vector.broadcast %2 : f32 to vector<8x16x16xf32>
    %6 = arith.mulf %4, %5 : vector<8x16x16xf32>
    %7 = math.exp %6 : vector<8x16x16xf32>
    %8 = vector.broadcast %1 : f32 to vector<8x16x16xf32>
    %9 = arith.mulf %8, %7 : vector<8x16x16xf32>
    %cst = arith.constant 0.000000e+00 : f32
    %10 = vector.broadcast %cst : f32 to vector<8x16x16xf32>
    %11 = arith.cmpf oge, %3, %10 : vector<8x16x16xf32>
    %12 = vector.broadcast %0 : f32 to vector<8x16x16xf32>
    %13 = arith.subf %12, %9 : vector<8x16x16xf32>
    %14 = arith.select %11, %9, %13 : vector<8x16x16xi1>, vector<8x16x16xf32>
    %c0_3 = arith.constant 0 : index
    %c0_4 = arith.constant 0 : index
    %c0_5 = arith.constant 0 : index
    %15 = vector.load %arg4[%c0_3, %c0_4, %c0_5] : memref<8x16x16xf32, #tpu.memory_space<vmem>>, vector<8x16x16xf32>
    tpu.vector_store %arg4[%c0_3, %c0_4, %c0_5], %14 {strides = array<i32>} : memref<8x16x16xf32, #tpu.memory_space<vmem>>, vector<8x16x16xf32>,
    return
  }
  func.func @transform_0(%arg0: i32, %arg1: i32) -> i32 {
    %c0_i32 = arith.constant 0 : i32
    %c0_i32_0 = arith.constant 0 : i32
    return %c0_i32 : i32
  }
  func.func @transform_1(%arg0: i32, %arg1: i32) -> (i32, i32, i32) {
    %c0_i32 = arith.constant 0 : i32
    %c0_i32_0 = arith.constant 0 : i32
    return %arg0, %arg1, %c0_i32 : i32, i32, i32
  }
  func.func @transform_2(%arg0: i32, %arg1: i32) -> (i32, i32, i32) {
    %c0_i32 = arith.constant 0 : i32
    %c0_i32_0 = arith.constant 0 : i32
    return %arg0, %arg1, %c0_i32 : i32, i32, i32
  }
}

</mosaic_0001>

<llo_original>
// kernel: tpu_custom_call.1
$region0: #{tpu_custom_call.1}
  #allocation0 [shape = 'u32[]', space=smem, size = 0x4, offset = 0x4, fixed_abs, tag = 'smem constant byte address 0x4 - core index']
  #allocation1 [shape = 'u32[144,128]{1,0:T(1,128)}', space=vmem, size = 0x12000, scoped, tag = 'internal scratch']
  %s0 = inlined_call_operand.hbm [shape: f32[3], index: 0, kind: input, shape index: {}]
  %s1 = inlined_call_operand.hbm [shape: f32[8,16,16], index: 1, kind: input, shape index: {}]
  %s2 = inlined_call_operand.hbm [shape: f32[8,16,16], index: 2, kind: output, shape index: {}]
  %s3 = sld [smem:[#allocation0]]
  $region26: #{tpu_custom_call.1} parent=0
    _
  %s5 = ssub.s32 1, %s3
  %s6 = scalar_select 0, %s5, %s3
  $region1: #{tpu_custom_call.1} parent=0
    #allocation2 [shape = 'u8[512]{0}', space=smem, size = 0x200, scoped, tag = 'input window, operand 0, single buffered']
    #allocation3 [shape = 's32[1]{0}', space=sflag, size = 0x4, scoped, tag = 'scoped memory for tpu_custom_call.1']
    #allocation4 [shape = 's32[1]{0}', space=sflag, size = 0x4, scoped, tag = 'scoped memory for tpu_custom_call.1']
    #allocation5 [shape = 's32[1]{0}', space=sflag, size = 0x4, scoped, tag = 'scoped memory for tpu_custom_call.1']
    #allocation6 [shape = 'u8[65536]{0}', space=vmem, size = 0x10000, scoped, tag = 'input window, operand 1, single buffered']
    #allocation7 [shape = 'u8[65536]{0}', space=vmem, size = 0x10000, scoped, tag = 'output window, operand 0, single buffered']
    %7 = vsyncpa [#allocation5], 0
    %8 = vsyncpa [#allocation3], 0
    %9 = vsyncpa [#allocation4], 0
    // Predicated region
    $region2: #{tpu_custom_call.1} parent=1 // pred_check
      _
    $region3: #{tpu_custom_call.1} parent=1 // pred_check_branch
      %11 = sbr.rel (0) target = $region5
    $region4: #{tpu_custom_call.1} parent=1 // pred_region
      %s13 = ssub.s32 16, 16
      %14 = vsyncadd [#allocation5], %s13
      %17 = dma.hbm_to_smem %s0, 16, [#allocation2], [#allocation5]
    $region5: #{tpu_custom_call.1} parent=1 // pred_fallthru
      _
    // Predicated region
    $region6: #{tpu_custom_call.1} parent=1 // pred_check
      _
    $region7: #{tpu_custom_call.1} parent=1 // pred_check_branch
      %19 = sbr.rel (0) target = $region9
    $region8: #{tpu_custom_call.1} parent=1 // pred_region
      %s21 = ssub.s32 2048, 2048
      %22 = vsyncadd [#allocation3], %s21
      %s23 = sshll.u32 [#allocation6], 4
      %s24 = int_to_ptr.vmem [resolvable:$true] %s23
      %29 = dma.hbm_to_vmem [thread:$0]  %s1, 2048, %s24, [#allocation3], 128, 128, 8
    $region9: #{tpu_custom_call.1} parent=1 // pred_fallthru
      _
    // Predicated region
    $region10: #{tpu_custom_call.1} parent=1 // pred_check
      _
    $region11: #{tpu_custom_call.1} parent=1 // pred_check_branch
      %31 = sbr.rel (0) target = $region13
    $region12: #{tpu_custom_call.1} parent=1 // pred_region
      %32 = dma.done [#allocation5], 16
    $region13: #{tpu_custom_call.1} parent=1 // pred_fallthru
      _
    // Predicated region
    $region14: #{tpu_custom_call.1} parent=1 // pred_check
      _
    $region15: #{tpu_custom_call.1} parent=1 // pred_check_branch
      %34 = sbr.rel (0) target = $region17
    $region16: #{tpu_custom_call.1} parent=1 // pred_region
      %35 = dma.done [#allocation3], 2048
    $region17: #{tpu_custom_call.1} parent=1 // pred_fallthru
      _
    %36 = sfence
    %s37 = sld [smem:[#allocation2]]
    %s38 = sld [smem:[#allocation2 + $0x1]]
    %s39 = sld [smem:[#allocation2 + $0x2]]
    %v40 = vld [vmem:[#allocation6] sm:$0xff]
    %v41 = vld [vmem:[#allocation6 + $0x8] sm:$0xff]
    %v42 = vld [vmem:[#allocation6 + $0x10] sm:$0xff]
    %v43 = vld [vmem:[#allocation6 + $0x18] sm:$0xff]
    %v44 = vld [vmem:[#allocation6 + $0x20] sm:$0xff]
    %v45 = vld [vmem:[#allocation6 + $0x28] sm:$0xff]
    %v46 = vld [vmem:[#allocation6 + $0x30] sm:$0xff]
    %v47 = vld [vmem:[#allocation6 + $0x38] sm:$0xff]
    %v48 = vld [vmem:[#allocation6 + $0x40] sm:$0xff]
    %v49 = vld [vmem:[#allocation6 + $0x48] sm:$0xff]
    %v50 = vld [vmem:[#allocation6 + $0x50] sm:$0xff]
    %v51 = vld [vmem:[#allocation6 + $0x58] sm:$0xff]
    %v52 = vld [vmem:[#allocation6 + $0x60] sm:$0xff]
    %v53 = vld [vmem:[#allocation6 + $0x68] sm:$0xff]
    %v54 = vld [vmem:[#allocation6 + $0x70] sm:$0xff]
    %v55 = vld [vmem:[#allocation6 + $0x78] sm:$0xff]
    %v56 = vand.u32 2147483647, %v40
    %v57 = vand.u32 2147483647, %v41
    %v58 = vand.u32 2147483647, %v42
    %v59 = vand.u32 2147483647, %v43
    %v60 = vand.u32 2147483647, %v44
    %v61 = vand.u32 2147483647, %v45
    %v62 = vand.u32 2147483647, %v46
    %v63 = vand.u32 2147483647, %v47
    %v64 = vand.u32 2147483647, %v48
    %v65 = vand.u32 2147483647, %v49
    %v66 = vand.u32 2147483647, %v50
    %v67 = vand.u32 2147483647, %v51
    %v68 = vand.u32 2147483647, %v52
    %v69 = vand.u32 2147483647, %v53
    %v70 = vand.u32 2147483647, %v54
    %v71 = vand.u32 2147483647, %v55
    %v72 = vstv %s39
    %v73 = vmul.f32 %v56, %v72
    %v74 = vmul.f32 %v57, %v72
    %v75 = vmul.f32 %v58, %v72
    %v76 = vmul.f32 %v59, %v72
    %v77 = vmul.f32 %v60, %v72
    %v78 = vmul.f32 %v61, %v72
    %v79 = vmul.f32 %v62, %v72
    %v80 = vmul.f32 %v63, %v72
    %v81 = vmul.f32 %v64, %v72
    %v82 = vmul.f32 %v65, %v72
    %v83 = vmul.f32 %v66, %v72
    %v84 = vmul.f32 %v67, %v72
    %v85 = vmul.f32 %v68, %v72
    %v86 = vmul.f32 %v69, %v72
    %v87 = vmul.f32 %v70, %v72
    %v88 = vmul.f32 %v71, %v72
    %v89 = vmul.f32 %v73, 1.442695
    %v90 = vpow.pop %v89
    %v91 = vmul.f32 %v74, 1.442695
    %v92 = vpow.pop %v91
    %v93 = vmul.f32 %v75, 1.442695
    %v94 = vpow.pop %v93
    %v95 = vmul.f32 %v76, 1.442695
    %v96 = vpow.pop %v95
    %v97 = vmul.f32 %v77, 1.442695
    %v98 = vpow.pop %v97
    %v99 = vmul.f32 %v78, 1.442695
    %v100 = vpow.pop %v99
    %v101 = vmul.f32 %v79, 1.442695
    %v102 = vpow.pop %v101
    %v103 = vmul.f32 %v80, 1.442695
    %v104 = vpow.pop %v103
    %v105 = vmul.f32 %v81, 1.442695
    %v106 = vpow.pop %v105
    %v107 = vmul.f32 %v82, 1.442695
    %v108 = vpow.pop %v107
    %v109 = vmul.f32 %v83, 1.442695
    %v110 = vpow.pop %v109
    %v111 = vmul.f32 %v84, 1.442695
    %v112 = vpow.pop %v111
    %v113 = vmul.f32 %v85, 1.442695
    %v114 = vpow.pop %v113
    %v115 = vmul.f32 %v86, 1.442695
    %v116 = vpow.pop %v115
    %v117 = vmul.f32 %v87, 1.442695
    %v118 = vpow.pop %v117
    %v119 = vmul.f32 %v88, 1.442695
    %v120 = vpow.pop %v119
    %v121 = vstv %s38
    %v122 = vmul.f32 %v121, %v90
    %v123 = vmul.f32 %v121, %v92
    %v124 = vmul.f32 %v121, %v94
    %v125 = vmul.f32 %v121, %v96
    %v126 = vmul.f32 %v121, %v98
    %v127 = vmul.f32 %v121, %v100
    %v128 = vmul.f32 %v121, %v102
    %v129 = vmul.f32 %v121, %v104
    %v130 = vmul.f32 %v121, %v106
    %v131 = vmul.f32 %v121, %v108
    %v132 = vmul.f32 %v121, %v110
    %v133 = vmul.f32 %v121, %v112
    %v134 = vmul.f32 %v121, %v114
    %v135 = vmul.f32 %v121, %v116
    %v136 = vmul.f32 %v121, %v118
    %v137 = vmul.f32 %v121, %v120
    %vm138 = vcmp.ge.f32.partialorder %v40, 0.0
    %vm139 = vcmp.ge.f32.partialorder %v41, 0.0
    %vm140 = vcmp.ge.f32.partialorder %v42, 0.0
    %vm141 = vcmp.ge.f32.partialorder %v43, 0.0
    %vm142 = vcmp.ge.f32.partialorder %v44, 0.0
    %vm143 = vcmp.ge.f32.partialorder %v45, 0.0
    %vm144 = vcmp.ge.f32.partialorder %v46, 0.0
    %vm145 = vcmp.ge.f32.partialorder %v47, 0.0
    %vm146 = vcmp.ge.f32.partialorder %v48, 0.0
    %vm147 = vcmp.ge.f32.partialorder %v49, 0.0
    %vm148 = vcmp.ge.f32.partialorder %v50, 0.0
    %vm149 = vcmp.ge.f32.partialorder %v51, 0.0
    %vm150 = vcmp.ge.f32.partialorder %v52, 0.0
    %vm151 = vcmp.ge.f32.partialorder %v53, 0.0
    %vm152 = vcmp.ge.f32.partialorder %v54, 0.0
    %vm153 = vcmp.ge.f32.partialorder %v55, 0.0
    %v154 = vstv %s37
    %v155 = vsub.f32 %v154, %v122
    %v156 = vsub.f32 %v154, %v123
    %v157 = vsub.f32 %v154, %v124
    %v158 = vsub.f32 %v154, %v125
    %v159 = vsub.f32 %v154, %v126
    %v160 = vsub.f32 %v154, %v127
    %v161 = vsub.f32 %v154, %v128
    %v162 = vsub.f32 %v154, %v129
    %v163 = vsub.f32 %v154, %v130
    %v164 = vsub.f32 %v154, %v131
    %v165 = vsub.f32 %v154, %v132
    %v166 = vsub.f32 %v154, %v133
    %v167 = vsub.f32 %v154, %v134
    %v168 = vsub.f32 %v154, %v135
    %v169 = vsub.f32 %v154, %v136
    %v170 = vsub.f32 %v154, %v137
    %v171 = vsel %vm138, %v122, %v155
    %v172 = vsel %vm139, %v123, %v156
    %v173 = vsel %vm140, %v124, %v157
    %v174 = vsel %vm141, %v125, %v158
    %v175 = vsel %vm142, %v126, %v159
    %v176 = vsel %vm143, %v127, %v160
    %v177 = vsel %vm144, %v128, %v161
    %v178 = vsel %vm145, %v129, %v162
    %v179 = vsel %vm146, %v130, %v163
    %v180 = vsel %vm147, %v131, %v164
    %v181 = vsel %vm148, %v132, %v165
    %v182 = vsel %vm149, %v133, %v166
    %v183 = vsel %vm150, %v134, %v167
    %v184 = vsel %vm151, %v135, %v168
    %v185 = vsel %vm152, %v136, %v169
    %v186 = vsel %vm153, %v137, %v170
    %vm187 = vcmask 130048
    %188 = vst.msk [vmem:[#allocation7] sm:$0xff] %vm187, %v171
    %189 = vst.msk [vmem:[#allocation7 + $0x8] sm:$0xff] %vm187, %v172
    %190 = vst.msk [vmem:[#allocation7 + $0x10] sm:$0xff] %vm187, %v173
    %191 = vst.msk [vmem:[#allocation7 + $0x18] sm:$0xff] %vm187, %v174
    %192 = vst.msk [vmem:[#allocation7 + $0x20] sm:$0xff] %vm187, %v175
    %193 = vst.msk [vmem:[#allocation7 + $0x28] sm:$0xff] %vm187, %v176
    %194 = vst.msk [vmem:[#allocation7 + $0x30] sm:$0xff] %vm187, %v177
    %195 = vst.msk [vmem:[#allocation7 + $0x38] sm:$0xff] %vm187, %v178
    %196 = vst.msk [vmem:[#allocation7 + $0x40] sm:$0xff] %vm187, %v179
    %197 = vst.msk [vmem:[#allocation7 + $0x48] sm:$0xff] %vm187, %v180
    %198 = vst.msk [vmem:[#allocation7 + $0x50] sm:$0xff] %vm187, %v181
    %199 = vst.msk [vmem:[#allocation7 + $0x58] sm:$0xff] %vm187, %v182
    %200 = vst.msk [vmem:[#allocation7 + $0x60] sm:$0xff] %vm187, %v183
    %201 = vst.msk [vmem:[#allocation7 + $0x68] sm:$0xff] %vm187, %v184
    %202 = vst.msk [vmem:[#allocation7 + $0x70] sm:$0xff] %vm187, %v185
    %203 = vst.msk [vmem:[#allocation7 + $0x78] sm:$0xff] %vm187, %v186
    // Predicated region
    $region18: #{tpu_custom_call.1} parent=1 // pred_check
      _
    $region19: #{tpu_custom_call.1} parent=1 // pred_check_branch
      %205 = sbr.rel (0) target = $region21
    $region20: #{tpu_custom_call.1} parent=1 // pred_region
      %s207 = ssub.s32 2048, 2048
      %208 = vsyncadd [#allocation4], %s207
      %s209 = sshll.u32 [#allocation7], 4
      %s210 = int_to_ptr.vmem [resolvable:$true] %s209
      %215 = dma.vmem_to_hbm [thread:$0]  %s210, 2048, %s2, [#allocation4], 128, 128, 8
    $region21: #{tpu_custom_call.1} parent=1 // pred_fallthru
      _
    // Predicated region
    $region22: #{tpu_custom_call.1} parent=1 // pred_check
      _
    $region23: #{tpu_custom_call.1} parent=1 // pred_check_branch
      %217 = sbr.rel (0) target = $region25
    $region24: #{tpu_custom_call.1} parent=1 // pred_region
      %218 = dma.done [#allocation4], 2048
    $region25: #{tpu_custom_call.1} parent=1 // pred_fallthru
      _
    %219 = vsyncpa [#allocation3], 1
    %220 = vsyncpa [#allocation4], 1
    %221 = vsyncpa [#allocation5], 1

</llo_original>
